<compile_context>
chip_gen: v5e
topology: v5e:2x2
jax: 0.10.0
libtpu: 0.0.40
codegen_flags: <defaults>
</compile_context>

<pallas_src>
import functools

import jax
import jax.numpy as jnp
from jax.experimental import pallas as pl
from jax.experimental.pallas import tpu as pltpu


# ------------------------------ fused CNN kernel ------------------------------
def _cnn_kernel(text_ref, wconv_ref, bconv_ref, wfcT_ref, bfc_ref,
                logp_ref, xcat_ref, *, B, S, filter_sizes, num_filter):
    F_ = num_filter

    # One wide MXU matmul covering every conv filter bank and every height shift.
    #   P[b*S + s, col(k,i) + f] = text[b, s, :] . W_k[f, i, :]
    P = jnp.dot(text_ref[...], wconv_ref[...],
                preferred_element_type=jnp.float32)          # (B*S, sum_k fs_k*F)
    P = P.reshape(B, S, -1)                                   # (B, S, totF)
    bconv = bconv_ref[...]                                    # (1, nK*F)

    pooled = []
    col = 0
    for k, fs in enumerate(filter_sizes):                     # static python loop
        L = S - fs + 1
        # conv_k[b, t, f] = sum_i P[b, t+i, col + i*F + f]
        acc = P[:, 0:L, col:col + F_]
        for i in range(1, fs):
            acc = acc + P[:, i:i + L, col + i * F_: col + (i + 1) * F_]
        col += fs * F_
        acc = acc + bconv[0, k * F_:(k + 1) * F_][None, None, :]
        conv = jnp.maximum(acc, 0.0)                          # ReLU
        pooled.append(jnp.max(conv, axis=1))                  # max over time -> (B, F)

    x_cat = jnp.concatenate(pooled, axis=1)                   # (B, nK*F)
    xcat_ref[...] = x_cat

    # classifier + log_softmax over the class axis
    logits = jnp.dot(x_cat, wfcT_ref[...],
                     preferred_element_type=jnp.float32) + bfc_ref[...]   # (B, C)
    m = jnp.max(logits, axis=-1, keepdims=True)
    lse = m + jnp.log(jnp.sum(jnp.exp(logits - m), axis=-1, keepdims=True))
    logp_ref[...] = logits - lse


def cnn_forward_pallas(params, text, qmask, umask, *, filter_sizes, num_filter):
    """text: (seq_len, batch, emb). qmask/umask accepted but unused (as in PyTorch)."""
    del qmask, umask
    S, B, E = text.shape
    F_ = num_filter
    nK = len(filter_sizes)
    totF = sum(filter_sizes) * F_
    C = params['fc_w'].shape[0]

    # -------- layout glue done once in the wrapper (mirrors text.permute(1,0,2)) ----
    text2d = jnp.transpose(text, (1, 0, 2)).reshape(B * S, E)     # (B*S, E), E lane-dense
    w_blocks = []
    for k, fs in enumerate(filter_sizes):
        Wk = params['conv_w'][k]                                   # (F, fs, E)
        for i in range(fs):
            w_blocks.append(jnp.transpose(Wk[:, i, :]))            # (E, F)
    w_all = jnp.concatenate(w_blocks, axis=1)                      # (E, totF)
    b_all = jnp.concatenate(params['conv_b'], axis=0)[None, :]     # (1, nK*F)
    wfcT = jnp.transpose(params['fc_w'])                           # (nK*F, C)
    bfc = params['fc_b'][None, :]                                  # (1, C)

    kernel = functools.partial(_cnn_kernel, B=B, S=S,
                               filter_sizes=tuple(filter_sizes), num_filter=F_)

    log_prob, x_cat = pl.pallas_call(
        kernel,
        out_shape=(jax.ShapeDtypeStruct((B, C), jnp.float32),
                   jax.ShapeDtypeStruct((B, nK * F_), jnp.float32)),
        grid_spec=pltpu.PrefetchScalarGridSpec(
            num_scalar_prefetch=0,
            grid=(1,),                                       # single fused invocation
            in_specs=[
                pl.BlockSpec((B * S, E), lambda i: (0, 0)),
                pl.BlockSpec((E, totF), lambda i: (0, 0)),
                pl.BlockSpec((1, nK * F_), lambda i: (0, 0)),
                pl.BlockSpec((nK * F_, C), lambda i: (0, 0)),
                pl.BlockSpec((1, C), lambda i: (0, 0)),
            ],
            out_specs=(pl.BlockSpec((B, C), lambda i: (0, 0)),
                       pl.BlockSpec((B, nK * F_), lambda i: (0, 0))),
        ),
        compiler_params=pltpu.CompilerParams(
            dimension_semantics=("arbitrary",)),
    )(text2d, w_all, b_all, wfcT, bfc)

    alpha, alpha_f, alpha_b = [], [], []
    return log_prob, alpha, alpha_f, alpha_b, x_cat


# ------------------------------ parameter init --------------------------------
def init_params(key, embedding_dim, num_filter, filter_sizes, output_dim):
    keys = iter(jax.random.split(key, 4 * len(filter_sizes) + 4))
    conv_w, conv_b = [], []
    for fs in filter_sizes:
        fan_in = 1 * fs * embedding_dim
        k = 1.0 / float(fan_in) ** 0.5
        conv_w.append(jax.random.uniform(next(keys), (num_filter, fs, embedding_dim),
                                         minval=-k, maxval=k, dtype=jnp.float32))
        conv_b.append(jax.random.uniform(next(keys), (num_filter,),
                                         minval=-k, maxval=k, dtype=jnp.float32))
    kf = 1.0 / float(len(filter_sizes) * num_filter) ** 0.5
    fc_w = jax.random.uniform(next(keys), (output_dim, len(filter_sizes) * num_filter),
                              minval=-kf, maxval=kf, dtype=jnp.float32)
    fc_b = jax.random.uniform(next(keys), (output_dim,),
                              minval=-kf, maxval=kf, dtype=jnp.float32)
    return {'conv_w': conv_w, 'conv_b': conv_b, 'fc_w': fc_w, 'fc_b': fc_b}


# -------------------------- pure-JAX reference (check) -------------------------
def reference_forward(params, text, *, filter_sizes, num_filter):
    text_bse = jnp.transpose(text, (1, 0, 2))                 # (B, S, E)
    B, S, E = text_bse.shape
    pooled = []
    for k, fs in enumerate(filter_sizes):
        W, b = params['conv_w'][k], params['conv_b'][k]       # (F, fs, E), (F,)
        L = S - fs + 1
        wins = jnp.stack([text_bse[:, t:t + fs, :] for t in range(L)], axis=1)  # (B,L,fs,E)
        conv = jnp.einsum('blfe,ofe->blo', wins, W) + b[None, None, :]
        conv = jax.nn.relu(conv)
        pooled.append(jnp.max(conv, axis=1))                  # (B, F)
    x_cat = jnp.concatenate(pooled, axis=1)                   # (B, nK*F)
    logits = x_cat @ params['fc_w'].T + params['fc_b']
    return jax.nn.log_softmax(logits, axis=-1), x_cat


if __name__ == "__main__":
    seq_len, batch = 16, 2
    embedding_dim, num_filter, output_dim = 32, 32, 7
    filter_sizes = (3, 4, 5)

    key = jax.random.PRNGKey(0)
    kp, kt = jax.random.split(key)
    params = init_params(kp, embedding_dim, num_filter, filter_sizes, output_dim)

    text = jax.random.normal(kt, (seq_len, batch, embedding_dim), dtype=jnp.float32)
    qmask = jnp.zeros((seq_len, batch, 2), jnp.float32)   # unused (as in the PyTorch forward)
    umask = jnp.ones((batch, seq_len), jnp.float32)       # unused (as in the PyTorch forward)

    log_prob, alpha, alpha_f, alpha_b, x_cat = cnn_forward_pallas(
        params, text, qmask, umask,
        filter_sizes=filter_sizes, num_filter=num_filter)
    log_prob = jax.block_until_ready(log_prob)
    x_cat = jax.block_until_ready(x_cat)

    assert log_prob.shape == (batch, output_dim)
    assert x_cat.shape == (batch, len(filter_sizes) * num_filter)
    assert alpha == [] and alpha_f == [] and alpha_b == []

    ref_logp, ref_xcat = reference_forward(params, text,
                                           filter_sizes=filter_sizes,
                                           num_filter=num_filter)
    assert jnp.allclose(log_prob, ref_logp, atol=1e-3, rtol=1e-3)
    assert jnp.allclose(x_cat, ref_xcat, atol=1e-3, rtol=1e-3)

    print("KERNEL_OK")
</pallas_src>

<mosaic_0001>
module attributes {stable_mosaic.version = 11 : i64} {
  func.func @_cnn_kernel(%arg0: i32, %arg1: memref<32x32xf32, #tpu.memory_space<vmem>>, %arg2: memref<32x384xf32, #tpu.memory_space<vmem>>, %arg3: memref<1x96xf32, #tpu.memory_space<vmem>>, %arg4: memref<96x7xf32, #tpu.memory_space<vmem>>, %arg5: memref<1x7xf32, #tpu.memory_space<vmem>>, %arg6: memref<2x7xf32, #tpu.memory_space<vmem>>, %arg7: memref<2x96xf32, #tpu.memory_space<vmem>>) attributes {dimension_semantics = [#tpu.dimension_semantics<arbitrary>], iteration_bounds = array<i64: 1>, scalar_prefetch = 0 : i64, scratch_operands = 0 : i64, tpu.core_type = #tpu.core_type<tc>, window_params = [{pipeline_mode = #tpu.pipeline_mode<synchronous>, transform_indices = @transform_0, window_bounds = array<i64: 32, 32>}, {pipeline_mode = #tpu.pipeline_mode<synchronous>, transform_indices = @transform_1, window_bounds = array<i64: 32, 384>}, {pipeline_mode = #tpu.pipeline_mode<synchronous>, transform_indices = @transform_2, window_bounds = array<i64: 1, 96>}, {pipeline_mode = #tpu.pipeline_mode<synchronous>, transform_indices = @transform_3, window_bounds = array<i64: 96, 7>}, {pipeline_mode = #tpu.pipeline_mode<synchronous>, transform_indices = @transform_4, window_bounds = array<i64: 1, 7>}, {pipeline_mode = #tpu.pipeline_mode<synchronous>, transform_indices = @transform_5, window_bounds = array<i64: 2, 7>}, {pipeline_mode = #tpu.pipeline_mode<synchronous>, transform_indices = @transform_6, window_bounds = array<i64: 2, 96>}]} {
    %c0 = arith.constant 0 : index
    %c0_0 = arith.constant 0 : index
    %0 = vector.load %arg1[%c0, %c0_0] : memref<32x32xf32, #tpu.memory_space<vmem>>, vector<32x32xf32>
    %c0_1 = arith.constant 0 : index
    %c0_2 = arith.constant 0 : index
    %1 = vector.load %arg2[%c0_1, %c0_2] : memref<32x384xf32, #tpu.memory_space<vmem>>, vector<32x384xf32>
    %cst = arith.constant dense<0.000000e+00> : vector<32x384xf32>
    %2 = tpu.matmul %0, %1, %cst {dimension_numbers = #tpu.dot_dimension_numbers<[1], [0], [0], [1], [0, 0, 1, 1], [], []>} : vector<32x32xf32>, vector<32x384xf32>, vector<32x384xf32> -> vector<32x384xf32>
    %3 = vector.shape_cast %2 : vector<32x384xf32> to vector<2x16x384xf32>
    %c0_3 = arith.constant 0 : index
    %c0_4 = arith.constant 0 : index
    %4 = vector.load %arg3[%c0_3, %c0_4] : memref<1x96xf32, #tpu.memory_space<vmem>>, vector<1x96xf32>
    %5 = vector.extract_strided_slice %3 {offsets = [0, 0, 0], sizes = [2, 14, 32], strides = [1, 1, 1]} : vector<2x16x384xf32> to vector<2x14x32xf32>
    %6 = vector.extract_strided_slice %3 {offsets = [0, 1, 32], sizes = [2, 14, 32], strides = [1, 1, 1]} : vector<2x16x384xf32> to vector<2x14x32xf32>
    %7 = arith.addf %5, %6 : vector<2x14x32xf32>
    %8 = vector.extract_strided_slice %3 {offsets = [0, 2, 64], sizes = [2, 14, 32], strides = [1, 1, 1]} : vector<2x16x384xf32> to vector<2x14x32xf32>
    %9 = arith.addf %7, %8 : vector<2x14x32xf32>
    %10 = vector.extract_strided_slice %4 {offsets = [0, 0], sizes = [1, 32], strides = [1, 1]} : vector<1x96xf32> to vector<1x32xf32>
    %11 = vector.shape_cast %10 : vector<1x32xf32> to vector<32xf32>
    %12 = vector.shape_cast %11 : vector<32xf32> to vector<1x1x32xf32>
    %13 = vector.broadcast %12 : vector<1x1x32xf32> to vector<2x14x32xf32>
    %14 = arith.addf %9, %13 : vector<2x14x32xf32>
    %cst_5 = arith.constant 0.000000e+00 : f32
    %15 = vector.broadcast %cst_5 : f32 to vector<2x14x32xf32>
    %16 = arith.maximumf %14, %15 : vector<2x14x32xf32>
    %cst_6 = arith.constant dense<0xFF800000> : vector<2x32xf32>
    %17 = vector.multi_reduction <maximumf>, %16, %cst_6 [1] : vector<2x14x32xf32> to vector<2x32xf32>
    %18 = vector.extract_strided_slice %3 {offsets = [0, 0, 96], sizes = [2, 13, 32], strides = [1, 1, 1]} : vector<2x16x384xf32> to vector<2x13x32xf32>
    %19 = vector.extract_strided_slice %3 {offsets = [0, 1, 128], sizes = [2, 13, 32], strides = [1, 1, 1]} : vector<2x16x384xf32> to vector<2x13x32xf32>
    %20 = arith.addf %18, %19 : vector<2x13x32xf32>
    %21 = vector.extract_strided_slice %3 {offsets = [0, 2, 160], sizes = [2, 13, 32], strides = [1, 1, 1]} : vector<2x16x384xf32> to vector<2x13x32xf32>
    %22 = arith.addf %20, %21 : vector<2x13x32xf32>
    %23 = vector.extract_strided_slice %3 {offsets = [0, 3, 192], sizes = [2, 13, 32], strides = [1, 1, 1]} : vector<2x16x384xf32> to vector<2x13x32xf32>
    %24 = arith.addf %22, %23 : vector<2x13x32xf32>
    %25 = vector.extract_strided_slice %4 {offsets = [0, 32], sizes = [1, 32], strides = [1, 1]} : vector<1x96xf32> to vector<1x32xf32>
    %26 = vector.shape_cast %25 : vector<1x32xf32> to vector<32xf32>
    %27 = vector.shape_cast %26 : vector<32xf32> to vector<1x1x32xf32>
    %28 = vector.broadcast %27 : vector<1x1x32xf32> to vector<2x13x32xf32>
    %29 = arith.addf %24, %28 : vector<2x13x32xf32>
    %cst_7 = arith.constant 0.000000e+00 : f32
    %30 = vector.broadcast %cst_7 : f32 to vector<2x13x32xf32>
    %31 = arith.maximumf %29, %30 : vector<2x13x32xf32>
    %cst_8 = arith.constant dense<0xFF800000> : vector<2x32xf32>
    %32 = vector.multi_reduction <maximumf>, %31, %cst_8 [1] : vector<2x13x32xf32> to vector<2x32xf32>
    %33 = vector.extract_strided_slice %3 {offsets = [0, 0, 224], sizes = [2, 12, 32], strides = [1, 1, 1]} : vector<2x16x384xf32> to vector<2x12x32xf32>
    %34 = vector.extract_strided_slice %3 {offsets = [0, 1, 256], sizes = [2, 12, 32], strides = [1, 1, 1]} : vector<2x16x384xf32> to vector<2x12x32xf32>
    %35 = arith.addf %33, %34 : vector<2x12x32xf32>
    %36 = vector.extract_strided_slice %3 {offsets = [0, 2, 288], sizes = [2, 12, 32], strides = [1, 1, 1]} : vector<2x16x384xf32> to vector<2x12x32xf32>
    %37 = arith.addf %35, %36 : vector<2x12x32xf32>
    %38 = vector.extract_strided_slice %3 {offsets = [0, 3, 320], sizes = [2, 12, 32], strides = [1, 1, 1]} : vector<2x16x384xf32> to vector<2x12x32xf32>
    %39 = arith.addf %37, %38 : vector<2x12x32xf32>
    %40 = vector.extract_strided_slice %3 {offsets = [0, 4, 352], sizes = [2, 12, 32], strides = [1, 1, 1]} : vector<2x16x384xf32> to vector<2x12x32xf32>
    %41 = arith.addf %39, %40 : vector<2x12x32xf32>
    %42 = vector.extract_strided_slice %4 {offsets = [0, 64], sizes = [1, 32], strides = [1, 1]} : vector<1x96xf32> to vector<1x32xf32>
    %43 = vector.shape_cast %42 : vector<1x32xf32> to vector<32xf32>
    %44 = vector.shape_cast %43 : vector<32xf32> to vector<1x1x32xf32>
    %45 = vector.broadcast %44 : vector<1x1x32xf32> to vector<2x12x32xf32>
    %46 = arith.addf %41, %45 : vector<2x12x32xf32>
    %cst_9 = arith.constant 0.000000e+00 : f32
    %47 = vector.broadcast %cst_9 : f32 to vector<2x12x32xf32>
    %48 = arith.maximumf %46, %47 : vector<2x12x32xf32>
    %cst_10 = arith.constant dense<0xFF800000> : vector<2x32xf32>
    %49 = vector.multi_reduction <maximumf>, %48, %cst_10 [1] : vector<2x12x32xf32> to vector<2x32xf32>
    %50 = tpu.concatenate %17, %32, %49 in 1 : vector<2x32xf32>, vector<2x32xf32>, vector<2x32xf32> -> vector<2x96xf32>
    %c0_11 = arith.constant 0 : index
    %c0_12 = arith.constant 0 : index
    %51 = vector.load %arg7[%c0_11, %c0_12] : memref<2x96xf32, #tpu.memory_space<vmem>>, vector<2x96xf32>
    tpu.vector_store %arg7[%c0_11, %c0_12], %50 {strides = array<i32>} : memref<2x96xf32, #tpu.memory_space<vmem>>, vector<2x96xf32>,
    %c0_13 = arith.constant 0 : index
    %c0_14 = arith.constant 0 : index
    %52 = vector.load %arg4[%c0_13, %c0_14] : memref<96x7xf32, #tpu.memory_space<vmem>>, vector<96x7xf32>
    %cst_15 = arith.constant dense<0.000000e+00> : vector<2x7xf32>
    %53 = tpu.matmul %50, %52, %cst_15 {dimension_numbers = #tpu.dot_dimension_numbers<[1], [0], [0], [1], [0, 0, 1, 1], [], []>} : vector<2x96xf32>, vector<96x7xf32>, vector<2x7xf32> -> vector<2x7xf32>
    %c0_16 = arith.constant 0 : index
    %c0_17 = arith.constant 0 : index
    %54 = vector.load %arg5[%c0_16, %c0_17] : memref<1x7xf32, #tpu.memory_space<vmem>>, vector<1x7xf32>
    %55 = vector.broadcast %54 : vector<1x7xf32> to vector<2x7xf32>
    %56 = arith.addf %53, %55 : vector<2x7xf32>
    %cst_18 = arith.constant dense<0xFF800000> : vector<2xf32>
    %57 = vector.multi_reduction <maximumf>, %56, %cst_18 [1] : vector<2x7xf32> to vector<2xf32>
    %58 = vector.shape_cast %57 : vector<2xf32> to vector<2x1xf32>
    %59 = vector.broadcast %58 : vector<2x1xf32> to vector<2x7xf32>
    %60 = arith.subf %56, %59 : vector<2x7xf32>
    %61 = math.exp %60 : vector<2x7xf32>
    %cst_19 = arith.constant dense<0.000000e+00> : vector<2xf32>
    %62 = vector.multi_reduction <add>, %61, %cst_19 [1] : vector<2x7xf32> to vector<2xf32>
    %63 = vector.shape_cast %62 : vector<2xf32> to vector<2x1xf32>
    %64 = math.log %63 : vector<2x1xf32>
    %65 = arith.addf %58, %64 : vector<2x1xf32>
    %66 = vector.broadcast %65 : vector<2x1xf32> to vector<2x7xf32>
    %67 = arith.subf %56, %66 : vector<2x7xf32>
    %c0_20 = arith.constant 0 : index
    %c0_21 = arith.constant 0 : index
    %68 = vector.load %arg6[%c0_20, %c0_21] : memref<2x7xf32, #tpu.memory_space<vmem>>, vector<2x7xf32>
    tpu.vector_store %arg6[%c0_20, %c0_21], %67 {strides = array<i32>} : memref<2x7xf32, #tpu.memory_space<vmem>>, vector<2x7xf32>,
    return
  }
  func.func @transform_0(%arg0: i32) -> (i32, i32) {
    %c0_i32 = arith.constant 0 : i32
    %c0_i32_0 = arith.constant 0 : i32
    %c0_i32_1 = arith.constant 0 : i32
    return %c0_i32, %c0_i32_0 : i32, i32
  }
  func.func @transform_1(%arg0: i32) -> (i32, i32) {
    %c0_i32 = arith.constant 0 : i32
    %c0_i32_0 = arith.constant 0 : i32
    %c0_i32_1 = arith.constant 0 : i32
    return %c0_i32, %c0_i32_0 : i32, i32
  }
  func.func @transform_2(%arg0: i32) -> (i32, i32) {
    %c0_i32 = arith.constant 0 : i32
    %c0_i32_0 = arith.constant 0 : i32
    %c0_i32_1 = arith.constant 0 : i32
    return %c0_i32, %c0_i32_0 : i32, i32
  }
  func.func @transform_3(%arg0: i32) -> (i32, i32) {
    %c0_i32 = arith.constant 0 : i32
    %c0_i32_0 = arith.constant 0 : i32
    %c0_i32_1 = arith.constant 0 : i32
    return %c0_i32, %c0_i32_0 : i32, i32
  }
  func.func @transform_4(%arg0: i32) -> (i32, i32) {
    %c0_i32 = arith.constant 0 : i32
    %c0_i32_0 = arith.constant 0 : i32
    %c0_i32_1 = arith.constant 0 : i32
    return %c0_i32, %c0_i32_0 : i32, i32
  }
  func.func @transform_5(%arg0: i32) -> (i32, i32) {
    %c0_i32 = arith.constant 0 : i32
    %c0_i32_0 = arith.constant 0 : i32
    %c0_i32_1 = arith.constant 0 : i32
    return %c0_i32, %c0_i32_0 : i32, i32
  }
  func.func @transform_6(%arg0: i32) -> (i32, i32) {
    %c0_i32 = arith.constant 0 : i32
    %c0_i32_0 = arith.constant 0 : i32
    %c0_i32_1 = arith.constant 0 : i32
    return %c0_i32, %c0_i32_0 : i32, i32
  }
}

</mosaic_0001>

<llo_original>
// kernel: tpu_custom_call.1
$region0: #{tpu_custom_call.1}
  #allocation0 [shape = 'u32[]', space=smem, size = 0x4, offset = 0x4, fixed_abs, tag = 'smem constant byte address 0x4 - core index']
  #allocation1 [shape = 'u32[72,128]{1,0:T(1,128)}', space=vmem, size = 0x9000, scoped, tag = 'internal scratch']
  %s0 = inlined_call_operand.hbm [shape: f32[32,32], index: 0, kind: input, shape index: {}]
  %s1 = inlined_call_operand.vmem [shape: f32[32,384], index: 1, kind: input, shape index: {}]
  %s2 = inlined_call_operand.vmem [shape: f32[1,96], index: 2, kind: input, shape index: {}]
  %s3 = inlined_call_operand.vmem [shape: f32[96,7], index: 3, kind: input, shape index: {}]
  %s4 = inlined_call_operand.vmem [shape: f32[1,7], index: 4, kind: input, shape index: {}]
  %s5 = inlined_call_operand.hbm [shape: f32[2,7], index: 5, kind: output, shape index: {0}]
  %s6 = inlined_call_operand.hbm [shape: f32[2,96], index: 6, kind: output, shape index: {1}]
  %7 = xla_tuple %s5, %s6
  %s8 = sld [smem:[#allocation0]]
  $region42: #{tpu_custom_call.1} parent=0
    _
  %s10 = ssub.s32 1, %s8
  %s11 = scalar_select 0, %s10, %s8
  $region1: #{tpu_custom_call.1} parent=0
    #allocation2 [shape = 'u8[16384]{0}', space=vmem, size = 0x4000, scoped, tag = 'input window, operand 0, single buffered']
    #allocation3 [shape = 's32[1]{0}', space=sflag, size = 0x4, scoped, tag = 'scoped memory for tpu_custom_call.1']
    #allocation4 [shape = 's32[1]{0}', space=sflag, size = 0x4, scoped, tag = 'scoped memory for tpu_custom_call.1']
    #allocation5 [shape = 'u8[1024]{0}', space=vmem, size = 0x400, scoped, tag = 'output window, operand 0, single buffered']
    #allocation6 [shape = 'u8[1024]{0}', space=vmem, size = 0x400, scoped, tag = 'output window, operand 1, single buffered']
    #allocation7 [shape = 's32[1]{0}', space=sflag, size = 0x4, scoped, tag = 'scoped memory for tpu_custom_call.1']
    %12 = vsyncpa [#allocation3], 0
    %13 = vsyncpa [#allocation4], 0
    %14 = vsyncpa [#allocation7], 0
    // Predicated region
    $region2: #{tpu_custom_call.1} parent=1 // pred_check
      _
    $region3: #{tpu_custom_call.1} parent=1 // pred_check_branch
      %16 = sbr.rel (0) target = $region5
    $region4: #{tpu_custom_call.1} parent=1 // pred_region
      %18 = vsyncadd [#allocation3], 0
      %s19 = sshll.u32 %s0, 4
      %s20 = int_to_ptr.hbm [resolvable:$true] %s19
      %s21 = sshll.u32 [#allocation2], 4
      %s22 = int_to_ptr.vmem [resolvable:$true] %s21
      %27 = dma.hbm_to_vmem [thread:$0]  %s20, 512, %s22, [#allocation3], 128, 128, 8
    $region5: #{tpu_custom_call.1} parent=1 // pred_fallthru
      _
    // Predicated region
    $region6: #{tpu_custom_call.1} parent=1 // pred_check
      _
    $region7: #{tpu_custom_call.1} parent=1 // pred_check_branch
      %29 = sbr.rel (0) target = $region9
    $region8: #{tpu_custom_call.1} parent=1 // pred_region
      _
    $region9: #{tpu_custom_call.1} parent=1 // pred_fallthru
      _
    // Predicated region
    $region10: #{tpu_custom_call.1} parent=1 // pred_check
      _
    $region11: #{tpu_custom_call.1} parent=1 // pred_check_branch
      %31 = sbr.rel (0) target = $region13
    $region12: #{tpu_custom_call.1} parent=1 // pred_region
      _
    $region13: #{tpu_custom_call.1} parent=1 // pred_fallthru
      _
    // Predicated region
    $region14: #{tpu_custom_call.1} parent=1 // pred_check
      _
    $region15: #{tpu_custom_call.1} parent=1 // pred_check_branch
      %33 = sbr.rel (0) target = $region17
    $region16: #{tpu_custom_call.1} parent=1 // pred_region
      _
    $region17: #{tpu_custom_call.1} parent=1 // pred_fallthru
      _
    // Predicated region
    $region18: #{tpu_custom_call.1} parent=1 // pred_check
      _
    $region19: #{tpu_custom_call.1} parent=1 // pred_check_branch
      %35 = sbr.rel (0) target = $region21
    $region20: #{tpu_custom_call.1} parent=1 // pred_region
      _
    $region21: #{tpu_custom_call.1} parent=1 // pred_fallthru
      _
    // Predicated region
    $region22: #{tpu_custom_call.1} parent=1 // pred_check
      _
    $region23: #{tpu_custom_call.1} parent=1 // pred_check_branch
      %37 = sbr.rel (0) target = $region25
    $region24: #{tpu_custom_call.1} parent=1 // pred_region
      %39 = dma.done [#allocation3], 512
    $region25: #{tpu_custom_call.1} parent=1 // pred_fallthru
      _
    %v40 = vld [vmem:[#allocation2] sm:$0xff]
    %v41 = vld [vmem:[#allocation2 + $0x8] sm:$0xff]
    %v42 = vld [vmem:[#allocation2 + $0x10] sm:$0xff]
    %v43 = vld [vmem:[#allocation2 + $0x18] sm:$0xff]
    %v44 = vld [vmem:[%s1] sm:$0xff]
    %v45 = vld [vmem:[%s1 + $0x8] sm:$0xff]
    %v46 = vld [vmem:[%s1 + $0x10] sm:$0xff]
    %v47 = vld [vmem:[%s1 + $0x18] sm:$0xff]
    %v48 = vld [vmem:[%s1 + $0x20] sm:$0xff]
    %v49 = vld [vmem:[%s1 + $0x28] sm:$0xff]
    %v50 = vld [vmem:[%s1 + $0x30] sm:$0xff]
    %v51 = vld [vmem:[%s1 + $0x38] sm:$0xff]
    %v52 = vld [vmem:[%s1 + $0x40] sm:$0xff]
    %v53 = vld [vmem:[%s1 + $0x48] sm:$0xff]
    %v54 = vld [vmem:[%s1 + $0x50] sm:$0xff]
    %v55 = vld [vmem:[%s1 + $0x58] sm:$0xff]
    %vm56 = vcmask 261120
    %v58 = vsel %vm56, %v40, 0
    %v61 = vsel %vm56, %v41, 0
    %v64 = vsel %vm56, %v42, 0
    %v67 = vsel %vm56, %v43, 0
    %69 = vmatpush.msra.mxu0 0.0
    %70 = vmatpush.msra.mxu0 0.0
    %71 = vmatpush.msra.mxu0 0.0
    %72 = vmatpush.msra.mxu0 0.0
    %73 = vmatpush.msra.mxu0 0.0
    %74 = vmatpush.msra.mxu0 0.0
    %75 = vmatpush.msra.mxu0 0.0
    %76 = vmatpush.msra.mxu0 0.0
    %77 = vmatpush.msra.mxu0 0.0
    %78 = vmatpush.msra.mxu0 0.0
    %79 = vmatpush.msra.mxu0 0.0
    %80 = vmatpush.msra.mxu0 0.0
    %81 = vmatpush.msra.mxu0 %v53
    %82 = vmatpush.msra.mxu0 %v50
    %83 = vmatpush.msra.mxu0 %v47
    %84 = vmatpush.msra.mxu0 %v44
    %85 = vmatmul.f32.gmra.mxu0 %v58
    %v86 = vpop.f32.mrf.mxu0
    %v87 = vadd.f32 0.0, %v86
    %88 = vmatmul.f32.gmra.mxu0 %v61
    %v89 = vpop.f32.mrf.mxu0
    %v90 = vadd.f32 0.0, %v89
    %91 = vmatmul.f32.gmra.mxu0 %v64
    %v92 = vpop.f32.mrf.mxu0
    %v93 = vadd.f32 0.0, %v92
    %94 = vmatmul.f32.gmra.mxu0 %v67
    %v95 = vpop.f32.mrf.mxu0
    %v96 = vadd.f32 0.0, %v95
    %97 = vdwg.mxu0
    %98 = vmatpush.msra.mxu0 0.0
    %99 = vmatpush.msra.mxu0 0.0
    %100 = vmatpush.msra.mxu0 0.0
    %101 = vmatpush.msra.mxu0 0.0
    %102 = vmatpush.msra.mxu0 0.0
    %103 = vmatpush.msra.mxu0 0.0
    %104 = vmatpush.msra.mxu0 0.0
    %105 = vmatpush.msra.mxu0 0.0
    %106 = vmatpush.msra.mxu0 0.0
    %107 = vmatpush.msra.mxu0 0.0
    %108 = vmatpush.msra.mxu0 0.0
    %109 = vmatpush.msra.mxu0 0.0
    %110 = vmatpush.msra.mxu0 %v54
    %111 = vmatpush.msra.mxu0 %v51
    %112 = vmatpush.msra.mxu0 %v48
    %113 = vmatpush.msra.mxu0 %v45
    %114 = vmatmul.f32.gmra.mxu0 %v58
    %v115 = vpop.f32.mrf.mxu0
    %v116 = vadd.f32 0.0, %v115
    %117 = vmatmul.f32.gmra.mxu0 %v61
    %v118 = vpop.f32.mrf.mxu0
    %v119 = vadd.f32 0.0, %v118
    %120 = vmatmul.f32.gmra.mxu0 %v64
    %v121 = vpop.f32.mrf.mxu0
    %v122 = vadd.f32 0.0, %v121
    %123 = vmatmul.f32.gmra.mxu0 %v67
    %v124 = vpop.f32.mrf.mxu0
    %v125 = vadd.f32 0.0, %v124
    %126 = vdwg.mxu0
    %127 = vmatpush.msra.mxu0 0.0
    %128 = vmatpush.msra.mxu0 0.0
    %129 = vmatpush.msra.mxu0 0.0
    %130 = vmatpush.msra.mxu0 0.0
    %131 = vmatpush.msra.mxu0 0.0
    %132 = vmatpush.msra.mxu0 0.0
    %133 = vmatpush.msra.mxu0 0.0
    %134 = vmatpush.msra.mxu0 0.0
    %135 = vmatpush.msra.mxu0 0.0
    %136 = vmatpush.msra.mxu0 0.0
    %137 = vmatpush.msra.mxu0 0.0
    %138 = vmatpush.msra.mxu0 0.0
    %139 = vmatpush.msra.mxu0 %v55
    %140 = vmatpush.msra.mxu0 %v52
    %141 = vmatpush.msra.mxu0 %v49
    %142 = vmatpush.msra.mxu0 %v46
    %143 = vmatmul.f32.gmra.mxu0 %v58
    %v144 = vpop.f32.mrf.mxu0
    %v145 = vadd.f32 0.0, %v144
    %146 = vmatmul.f32.gmra.mxu0 %v61
    %v147 = vpop.f32.mrf.mxu0
    %v148 = vadd.f32 0.0, %v147
    %149 = vmatmul.f32.gmra.mxu0 %v64
    %v150 = vpop.f32.mrf.mxu0
    %v151 = vadd.f32 0.0, %v150
    %152 = vmatmul.f32.gmra.mxu0 %v67
    %v153 = vpop.f32.mrf.mxu0
    %v154 = vadd.f32 0.0, %v153
    %155 = vdwg.mxu0
    %v156 = vld [vmem:[%s2] sm:$0x1]
    %vm161 = vcmask 1046528
    %v162 = vrot.slane %v87, 1
    %v163 = vrot.slane %v90, 1
    %v164 = vsel %vm161, %v162, %v163
    %v165 = vrot.slane %v93, 1
    %v166 = vrot.slane %v96, 1
    %v167 = vsel %vm161, %v165, %v166
    %168 = vrot.lane.b32.xlu0 %v164, 96
    %v169 = vpop.permute.xlu0 %168
    %170 = vrot.lane.b32.xlu0 %v163, 96
    %v171 = vpop.permute.xlu0 %170
    %172 = vrot.lane.b32.xlu0 %v167, 96
    %v173 = vpop.permute.xlu0 %172
    %174 = vrot.lane.b32.xlu0 %v166, 96
    %v175 = vpop.permute.xlu0 %174
    %v180 = vadd.f32 %v87, %v169
    %v181 = vadd.f32 %v90, %v171
    %v182 = vadd.f32 %v93, %v173
    %v183 = vadd.f32 %v96, %v175
    %vm184 = vcmask 1045504
    %v185 = vrot.slane %v87, 2
    %v186 = vrot.slane %v90, 2
    %v187 = vsel %vm184, %v185, %v186
    %v188 = vrot.slane %v93, 2
    %v189 = vrot.slane %v96, 2
    %v190 = vsel %vm184, %v188, %v189
    %191 = vrot.lane.b32.xlu0 %v187, 64
    %v192 = vpop.permute.xlu0 %191
    %193 = vrot.lane.b32.xlu0 %v186, 64
    %v194 = vpop.permute.xlu0 %193
    %195 = vrot.lane.b32.xlu0 %v190, 64
    %v196 = vpop.permute.xlu0 %195
    %197 = vrot.lane.b32.xlu0 %v189, 64
    %v198 = vpop.permute.xlu0 %197
    %v203 = vadd.f32 %v180, %v192
    %v204 = vadd.f32 %v181, %v194
    %v205 = vadd.f32 %v182, %v196
    %v206 = vadd.f32 %v183, %v198
    %v208 = vperm.slane %v156, 0
    %v210 = vadd.f32 %v203, %v208
    %v211 = vadd.f32 %v204, %v208
    %v212 = vadd.f32 %v205, %v208
    %v213 = vadd.f32 %v206, %v208
    %v214 = vmax.f32 %v210, 0.0
    %v215 = vmax.f32 %v211, 0.0
    %v216 = vmax.f32 %v212, 0.0
    %v217 = vmax.f32 %v213, 0.0
    %v218 = vsel %vm56, %v214, -inf
    %vm219 = vcmask 259072
    %v220 = vsel %vm219, %v215, -inf
    %v221 = vmax.f32 %v218, %v220
    %v222 = vrot.slane %v221, 4
    %v223 = vmax.f32 %v221, %v222
    %v224 = vrot.slane %v223, 2
    %v225 = vmax.f32 %v223, %v224
    %v226 = vrot.slane %v225, 1
    %v227 = vmax.f32 %v225, %v226
    %v228 = vsel %vm56, %v216, -inf
    %v229 = vsel %vm219, %v217, -inf
    %v230 = vmax.f32 %v228, %v229
    %v231 = vrot.slane %v230, 4
    %v232 = vmax.f32 %v230, %v231
    %v233 = vrot.slane %v232, 2
    %v234 = vmax.f32 %v232, %v233
    %v235 = vrot.slane %v234, 1
    %v236 = vmax.f32 %v234, %v235
    %v241 = vrot.slane %v116, 1
    %v242 = vrot.slane %v119, 1
    %v243 = vsel %vm161, %v241, %v242
    %v244 = vrot.slane %v122, 1
    %v245 = vrot.slane %v125, 1
    %v246 = vsel %vm161, %v244, %v245
    %247 = vrot.lane.b32.xlu0 %v243, 96
    %v248 = vpop.permute.xlu0 %247
    %249 = vrot.lane.b32.xlu0 %v242, 96
    %v250 = vpop.permute.xlu0 %249
    %251 = vrot.lane.b32.xlu0 %v246, 96
    %v252 = vpop.permute.xlu0 %251
    %253 = vrot.lane.b32.xlu0 %v245, 96
    %v254 = vpop.permute.xlu0 %253
    %v259 = vadd.f32 %v87, %v248
    %v260 = vadd.f32 %v90, %v250
    %v261 = vadd.f32 %v93, %v252
    %v262 = vadd.f32 %v96, %v254
    %v263 = vrot.slane %v116, 2
    %v264 = vrot.slane %v119, 2
    %v265 = vsel %vm184, %v263, %v264
    %v266 = vrot.slane %v122, 2
    %v267 = vrot.slane %v125, 2
    %v268 = vsel %vm184, %v266, %v267
    %269 = vrot.lane.b32.xlu0 %v265, 64
    %v270 = vpop.permute.xlu0 %269
    %271 = vrot.lane.b32.xlu0 %v264, 64
    %v272 = vpop.permute.xlu0 %271
    %273 = vrot.lane.b32.xlu0 %v268, 64
    %v274 = vpop.permute.xlu0 %273
    %275 = vrot.lane.b32.xlu0 %v267, 64
    %v276 = vpop.permute.xlu0 %275
    %v281 = vadd.f32 %v259, %v270
    %v282 = vadd.f32 %v260, %v272
    %v283 = vadd.f32 %v261, %v274
    %v284 = vadd.f32 %v262, %v276
    %vm285 = vcmask 1044480
    %v286 = vrot.slane %v116, 3
    %v287 = vrot.slane %v119, 3
    %v288 = vsel %vm285, %v286, %v287
    %v289 = vrot.slane %v122, 3
    %v290 = vrot.slane %v125, 3
    %v291 = vsel %vm285, %v289, %v290
    %292 = vrot.lane.b32.xlu0 %v288, 32
    %v293 = vpop.permute.xlu0 %292
    %294 = vrot.lane.b32.xlu0 %v287, 32
    %v295 = vpop.permute.xlu0 %294
    %296 = vrot.lane.b32.xlu0 %v291, 32
    %v297 = vpop.permute.xlu0 %296
    %298 = vrot.lane.b32.xlu0 %v290, 32
    %v299 = vpop.permute.xlu0 %298
    %v304 = vadd.f32 %v281, %v293
    %v305 = vadd.f32 %v282, %v295
    %v306 = vadd.f32 %v283, %v297
    %v307 = vadd.f32 %v284, %v299
    %308 = vrot.lane.b32.xlu0 %v208, 64
    %v309 = vpop.permute.xlu0 %308
    %v311 = vadd.f32 %v304, %v309
    %v312 = vadd.f32 %v305, %v309
    %v313 = vadd.f32 %v306, %v309
    %v314 = vadd.f32 %v307, %v309
    %v315 = vmax.f32 %v311, 0.0
    %v316 = vmax.f32 %v312, 0.0
    %v317 = vmax.f32 %v313, 0.0
    %v318 = vmax.f32 %v314, 0.0
    %vm319 = vcmask 1048320
    %v320 = vsel %vm319, %v315, -inf
    %vm321 = vcmask 1045248
    %v322 = vsel %vm321, %v316, -inf
    %v323 = vmax.f32 %v320, %v322
    %v324 = vrot.slane %v323, 4
    %v325 = vmax.f32 %v323, %v324
    %v326 = vrot.slane %v325, 2
    %v327 = vmax.f32 %v325, %v326
    %v328 = vrot.slane %v327, 1
    %v329 = vmax.f32 %v327, %v328
    %v330 = vsel %vm319, %v317, -inf
    %v331 = vsel %vm321, %v318, -inf
    %v332 = vmax.f32 %v330, %v331
    %v333 = vrot.slane %v332, 4
    %v334 = vmax.f32 %v332, %v333
    %v335 = vrot.slane %v334, 2
    %v336 = vmax.f32 %v334, %v335
    %v337 = vrot.slane %v336, 1
    %v338 = vmax.f32 %v336, %v337
    %v343 = vrot.slane %v145, 1
    %v344 = vrot.slane %v148, 1
    %v345 = vsel %vm161, %v343, %v344
    %v346 = vrot.slane %v151, 1
    %v347 = vrot.slane %v154, 1
    %v348 = vsel %vm161, %v346, %v347
    %349 = vrot.lane.b32.xlu0 %v345, 96
    %v350 = vpop.permute.xlu0 %349
    %351 = vrot.lane.b32.xlu0 %v344, 96
    %v352 = vpop.permute.xlu0 %351
    %353 = vrot.lane.b32.xlu0 %v348, 96
    %v354 = vpop.permute.xlu0 %353
    %355 = vrot.lane.b32.xlu0 %v347, 96
    %v356 = vpop.permute.xlu0 %355
    %v361 = vadd.f32 %v116, %v350
    %v362 = vadd.f32 %v119, %v352
    %v363 = vadd.f32 %v122, %v354
    %v364 = vadd.f32 %v125, %v356
    %v365 = vrot.slane %v145, 2
    %v366 = vrot.slane %v148, 2
    %v367 = vsel %vm184, %v365, %v366
    %v368 = vrot.slane %v151, 2
    %v369 = vrot.slane %v154, 2
    %v370 = vsel %vm184, %v368, %v369
    %371 = vrot.lane.b32.xlu0 %v367, 64
    %v372 = vpop.permute.xlu0 %371
    %373 = vrot.lane.b32.xlu0 %v366, 64
    %v374 = vpop.permute.xlu0 %373
    %375 = vrot.lane.b32.xlu0 %v370, 64
    %v376 = vpop.permute.xlu0 %375
    %377 = vrot.lane.b32.xlu0 %v369, 64
    %v378 = vpop.permute.xlu0 %377
    %v383 = vadd.f32 %v361, %v372
    %v384 = vadd.f32 %v362, %v374
    %v385 = vadd.f32 %v363, %v376
    %v386 = vadd.f32 %v364, %v378
    %v387 = vrot.slane %v145, 3
    %v388 = vrot.slane %v148, 3
    %v389 = vsel %vm285, %v387, %v388
    %v390 = vrot.slane %v151, 3
    %v391 = vrot.slane %v154, 3
    %v392 = vsel %vm285, %v390, %v391
    %393 = vrot.lane.b32.xlu0 %v389, 32
    %v394 = vpop.permute.xlu0 %393
    %395 = vrot.lane.b32.xlu0 %v388, 32
    %v396 = vpop.permute.xlu0 %395
    %397 = vrot.lane.b32.xlu0 %v392, 32
    %v398 = vpop.permute.xlu0 %397
    %399 = vrot.lane.b32.xlu0 %v391, 32
    %v400 = vpop.permute.xlu0 %399
    %v405 = vadd.f32 %v383, %v394
    %v406 = vadd.f32 %v384, %v396
    %v407 = vadd.f32 %v385, %v398
    %v408 = vadd.f32 %v386, %v400
    %vm409 = vcmask 1043456
    %v410 = vrot.slane %v145, 4
    %v411 = vrot.slane %v148, 4
    %v412 = vsel %vm409, %v410, %v411
    %v413 = vrot.slane %v151, 4
    %v414 = vrot.slane %v154, 4
    %v415 = vsel %vm409, %v413, %v414
    %v420 = vadd.f32 %v405, %v412
    %v421 = vadd.f32 %v406, %v411
    %v422 = vadd.f32 %v407, %v415
    %v423 = vadd.f32 %v408, %v414
    %424 = vrot.lane.b32.xlu0 %v208, 32
    %v425 = vpop.permute.xlu0 %424
    %v427 = vadd.f32 %v420, %v425
    %v428 = vadd.f32 %v421, %v425
    %v429 = vadd.f32 %v422, %v425
    %v430 = vadd.f32 %v423, %v425
    %v431 = vmax.f32 %v427, 0.0
    %v432 = vmax.f32 %v428, 0.0
    %v433 = vmax.f32 %v429, 0.0
    %v434 = vmax.f32 %v430, 0.0
    %v435 = vsel %vm319, %v431, -inf
    %vm436 = vcmask 1044224
    %v437 = vsel %vm436, %v432, -inf
    %v438 = vmax.f32 %v435, %v437
    %v439 = vrot.slane %v438, 4
    %v440 = vmax.f32 %v438, %v439
    %v441 = vrot.slane %v440, 2
    %v442 = vmax.f32 %v440, %v441
    %v443 = vrot.slane %v442, 1
    %v444 = vmax.f32 %v442, %v443
    %v445 = vsel %vm319, %v433, -inf
    %v446 = vsel %vm436, %v434, -inf
    %v447 = vmax.f32 %v445, %v446
    %v448 = vrot.slane %v447, 4
    %v449 = vmax.f32 %v447, %v448
    %v450 = vrot.slane %v449, 2
    %v451 = vmax.f32 %v449, %v450
    %v452 = vrot.slane %v451, 1
    %v453 = vmax.f32 %v451, %v452
    %vm456 = vcmask 1041409
    %v457 = vsel %vm456, %v236, %v227
    %v461 = vsel %vm456, %v338, %v329
    %462 = vrot.lane.b32.xlu0 %v461, 64
    %v463 = vpop.permute.xlu0 %462
    %v467 = vsel %vm456, %v453, %v444
    %468 = vrot.lane.b32.xlu0 %v467, 96
    %v469 = vpop.permute.xlu0 %468
    %v471 = vsel %vm56, %v457, %v463
    %vm472 = vcmask 523264
    %v473 = vsel %vm472, %v471, %v469
    %vm474 = vcmask 779264
    %475 = vst.msk [vmem:[#allocation6] sm:$0x3] %vm474, %v473
    %v476 = vld [vmem:[%s3] sm:$0xff]
    %v477 = vld [vmem:[%s3 + $0x8] sm:$0xff]
    %v478 = vld [vmem:[%s3 + $0x10] sm:$0xff]
    %v479 = vld [vmem:[%s3 + $0x18] sm:$0xff]
    %v480 = vld [vmem:[%s3 + $0x20] sm:$0xff]
    %v481 = vld [vmem:[%s3 + $0x28] sm:$0xff]
    %v482 = vld [vmem:[%s3 + $0x30] sm:$0xff]
    %v483 = vld [vmem:[%s3 + $0x38] sm:$0xff]
    %v484 = vld [vmem:[%s3 + $0x40] sm:$0xff]
    %v485 = vld [vmem:[%s3 + $0x48] sm:$0xff]
    %v486 = vld [vmem:[%s3 + $0x50] sm:$0xff]
    %v487 = vld [vmem:[%s3 + $0x58] sm:$0xff]
    %v488 = vld [vmem:[%s4] sm:$0x1]
    %v490 = vperm.slane %v488, 0
    %vm492 = vcmask 785408
    %v494 = vsel %vm492, %v473, 0
    %496 = vmatpush.msra.mxu0 0.0
    %497 = vmatpush.msra.mxu0 0.0
    %498 = vmatpush.msra.mxu0 0.0
    %499 = vmatpush.msra.mxu0 0.0
    %500 = vmatpush.msra.mxu0 %v487
    %501 = vmatpush.msra.mxu0 %v486
    %502 = vmatpush.msra.mxu0 %v485
    %503 = vmatpush.msra.mxu0 %v484
    %504 = vmatpush.msra.mxu0 %v483
    %505 = vmatpush.msra.mxu0 %v482
    %506 = vmatpush.msra.mxu0 %v481
    %507 = vmatpush.msra.mxu0 %v480
    %508 = vmatpush.msra.mxu0 %v479
    %509 = vmatpush.msra.mxu0 %v478
    %510 = vmatpush.msra.mxu0 %v477
    %511 = vmatpush.msra.mxu0 %v476
    %512 = vmatmul.f32.gmra.mxu0 %v494
    %v513 = vpop.f32.mrf.mxu0
    %v514 = vadd.f32 %v490, %v513
    %515 = vdwg.mxu0
    %vm516 = vcmask 50176
    %v517 = vsel %vm516, %v514, -inf
    %518 = vmax.xlane.f32.xlu0 %v517
    %v519 = vpop.xlane.xlu0 %518
    %v520 = vsub.f32 %v514, %v519
    %v521 = vmul.f32 %v520, 1.442695
    %v522 = vpow.pop %v521
    %v523 = vsel %vm516, %v522, 0.0
    %524 = vadd.xlane.f32.xlu0 %v523
    %v525 = vpop.xlane.xlu0 %524
    %v526 = vlog2.pop %v525
    %v527 = vmul.f32 %v526, 0.6931472
    %v528 = vadd.f32 %v519, %v527
    %v529 = vsub.f32 %v514, %v528
    %530 = vst.msk [vmem:[#allocation5] sm:$0x3] %vm516, %v529
    // Predicated region
    $region26: #{tpu_custom_call.1} parent=1 // pred_check
      _
    $region27: #{tpu_custom_call.1} parent=1 // pred_check_branch
      %532 = sbr.rel (0) target = $region29
    $region28: #{tpu_custom_call.1} parent=1 // pred_region
      %534 = vsyncadd [#allocation4], 0
      %s536 = sshll.u32 [#allocation5], 4
      %s537 = int_to_ptr.vmem [resolvable:$true] %s536
      %s538 = sshll.u32 %s5, 4
      %s539 = int_to_ptr.hbm [resolvable:$true] %s538
      %541 = dma.vmem_to_hbm [thread:$0]  %s537, 32, %s539, [#allocation4]
    $region29: #{tpu_custom_call.1} parent=1 // pred_fallthru
      _
    // Predicated region
    $region30: #{tpu_custom_call.1} parent=1 // pred_check
      _
    $region31: #{tpu_custom_call.1} parent=1 // pred_check_branch
      %543 = sbr.rel (0) target = $region33
    $region32: #{tpu_custom_call.1} parent=1 // pred_region
      %545 = vsyncadd [#allocation7], 0
      %s547 = sshll.u32 [#allocation6], 4
      %s548 = int_to_ptr.vmem [resolvable:$true] %s547
      %s549 = sshll.u32 %s6, 4
      %s550 = int_to_ptr.hbm [resolvable:$true] %s549
      %552 = dma.vmem_to_hbm [thread:$0]  %s548, 32, %s550, [#allocation7]
    $region33: #{tpu_custom_call.1} parent=1 // pred_fallthru
      _
    // Predicated region
    $region34: #{tpu_custom_call.1} parent=1 // pred_check
      _
    $region35: #{tpu_custom_call.1} parent=1 // pred_check_branch
      %554 = sbr.rel (0) target = $region37
    $region36: #{tpu_custom_call.1} parent=1 // pred_region
      %556 = dma.done [#allocation4], 32
    $region37: #{tpu_custom_call.1} parent=1 // pred_fallthru
      _
    // Predicated region
    $region38: #{tpu_custom_call.1} parent=1 // pred_check
      _
    $region39: #{tpu_custom_call.1} parent=1 // pred_check_branch
      %558 = sbr.rel (0) target = $region41
    $region40: #{tpu_custom_call.1} parent=1 // pred_region
      %560 = dma.done [#allocation7], 32
    $region41: #{tpu_custom_call.1} parent=1 // pred_fallthru
      _
    %561 = vsyncpa [#allocation3], 1
    %562 = vsyncpa [#allocation4], 1
    %563 = vsyncpa [#allocation7], 1

</llo_original>
